<compile_context>
chip_gen: v5e
topology: v5e:2x2
jax: 0.10.0
libtpu: 0.0.40
codegen_flags: <defaults>
</compile_context>

<pallas_src>
import jax
import jax.numpy as jnp
from jax.experimental import pallas as pl
from jax.experimental.pallas import tpu as pltpu

HIDDEN = 128     # head hidden width (fixed by the module: Linear(F, 128))
N_PAD = 128      # logits padded to a full lane width for dense stores


def transfer_learning_kernel(x_ref, wf_ref, b1_ref, w2_ref, b2_ref, o_ref, acc_ref):
    """Grid = (batch tiles [parallel], spatial tiles [arbitrary, last])."""
    s = pl.program_id(1)

    # --- init spatial-sum accumulator on the first spatial step ---
    @pl.when(s == 0)
    def _():
        acc_ref[...] = jnp.zeros_like(acc_ref)

    # --- synthetic backbone pooling: accumulate spatial sum (XLU reduce) ---
    # x_ref: [B_tile, C, S_tile]  ->  acc: [B_tile, C]
    acc_ref[...] += jnp.sum(x_ref[...], axis=-1)

    # --- finalize on the last spatial step: fused head ---
    @pl.when(s == pl.num_programs(1) - 1)
    def _():
        pooled = acc_ref[...].astype(jnp.bfloat16)                 # [B_tile, C]
        # fused (backbone projection + Linear(F,128)); 1/(H*W) folded into wf.
        h = jnp.dot(pooled, wf_ref[...],
                    preferred_element_type=jnp.float32) + b1_ref[...]  # [B_tile, 128]
        h = jnp.maximum(h, 0.0)                                    # ReLU
        # torch.nn.Dropout() is identity at inference (eval mode).
        # TODO(synk): training-mode dropout mask (p=0.5) not implemented.
        y = jnp.dot(h.astype(jnp.bfloat16), w2_ref[...],
                    preferred_element_type=jnp.float32) + b2_ref[...]  # [B_tile, 128]
        o_ref[...] = y.astype(o_ref.dtype)


def _pick_batch_tile(B):
    for cand in (256, 128, 64, 32, 16, 8):
        if B % cand == 0:
            return cand
    return B


def _pick_spatial_tile(b_tile, C, HW, bytes_per_elem=4,
                       vmem_budget=24 * 1024 * 1024):
    """Largest spatial tile whose double-buffered x tile fits the VMEM budget
    (budget chosen to be safe on v7x's 64 MiB physical / 32 MiB scoped VMEM)."""
    def fits(s):
        return 2 * b_tile * C * s * bytes_per_elem <= vmem_budget
    if fits(HW):
        return HW                      # whole image per step (full-dim block OK)
    assert HW % 128 == 0, "H*W must be a multiple of 128 to tile spatially"
    s_tile = 128
    while HW % (s_tile * 2) == 0 and fits(s_tile * 2):
        s_tile *= 2
    return s_tile


def transfer_learning_forward(x, wp, w1, b1, w2, b2):
    """x: [B, C, H, W] float32.  Returns logits [B, 2] float32."""
    B, C, H, W = x.shape
    HW = H * W
    x_flat = x.reshape(B, C, HW)

    # Host-side fusion of frozen backbone projection + first head layer, with
    # the 1/(H*W) mean-pool scale folded into the fused weight. bf16 operands.
    w_fused = ((wp @ w1) * (1.0 / float(HW))).astype(jnp.bfloat16)   # [C, 128]
    b1_r = b1.reshape(1, HIDDEN).astype(jnp.float32)                 # [1, 128]

    # Pad the 2-wide logit head to 128 output lanes (lane-dense store).
    n_out = w2.shape[1]
    w2_pad = jnp.zeros((HIDDEN, N_PAD), jnp.bfloat16)
    w2_pad = w2_pad.at[:, :n_out].set(w2.astype(jnp.bfloat16))
    b2_pad = jnp.zeros((1, N_PAD), jnp.float32)
    b2_pad = b2_pad.at[:, :n_out].set(b2.reshape(1, n_out))

    b_tile = _pick_batch_tile(B)
    s_tile = _pick_spatial_tile(b_tile, C, HW)
    grid = (B // b_tile, HW // s_tile)

    out_padded = pl.pallas_call(
        transfer_learning_kernel,
        out_shape=jax.ShapeDtypeStruct((B, N_PAD), jnp.float32),
        grid_spec=pltpu.PrefetchScalarGridSpec(
            num_scalar_prefetch=0,
            grid=grid,
            in_specs=[
                # images: tiled over batch and spatial
                pl.BlockSpec((b_tile, C, s_tile), lambda b, s: (b, 0, s)),
                # weights / biases: same (only) block every step
                pl.BlockSpec((C, HIDDEN), lambda b, s: (0, 0)),
                pl.BlockSpec((1, HIDDEN), lambda b, s: (0, 0)),
                pl.BlockSpec((HIDDEN, N_PAD), lambda b, s: (0, 0)),
                pl.BlockSpec((1, N_PAD), lambda b, s: (0, 0)),
            ],
            out_specs=pl.BlockSpec((b_tile, N_PAD), lambda b, s: (b, 0)),
            scratch_shapes=[pltpu.VMEM((b_tile, C), jnp.float32)],
        ),
        compiler_params=pltpu.CompilerParams(
            dimension_semantics=("parallel", "arbitrary"),
            vmem_limit_bytes=32 * 1024 * 1024,
        ),
    )(x_flat, w_fused, b1_r, w2_pad, b2_pad)

    return out_padded[:, :n_out]


def _init_params(key, C, F, H_hidden=HIDDEN, n_out=2):
    """Deterministic parameter init (uniform +-1/sqrt(fan_in), PyTorch-style)."""
    k = jax.random.split(key, 6)
    wp = jax.random.uniform(k[0], (C, F), jnp.float32, -1.0, 1.0) / jnp.sqrt(C)
    w1 = jax.random.uniform(k[1], (F, H_hidden), jnp.float32, -1.0, 1.0) / jnp.sqrt(F)
    b1 = jax.random.uniform(k[2], (1, H_hidden), jnp.float32, -1.0, 1.0) / jnp.sqrt(F)
    w2 = jax.random.uniform(k[3], (H_hidden, n_out), jnp.float32, -1.0, 1.0) / jnp.sqrt(H_hidden)
    b2 = jax.random.uniform(k[4], (1, n_out), jnp.float32, -1.0, 1.0) / jnp.sqrt(H_hidden)
    return wp, w1, b1, w2, b2


if __name__ == "__main__":
    key = jax.random.PRNGKey(0)
    kx, kp = jax.random.split(key)

    # Small demo shapes: batch=2, channels=4, spatial=16x16, in_features=32.
    B, C, H, W = 2, 4, 16, 16
    F = 32  # stand-in for trained_model.heads[0].in_features

    x = jax.random.normal(kx, (B, C, H, W), jnp.float32)
    wp, w1, b1, w2, b2 = _init_params(kp, C, F)

    out = transfer_learning_forward(x, wp, w1, b1, w2, b2)
    out = jax.block_until_ready(out)

    # Pure-JAX f32 reference of the same math (kernel uses bf16 MXU operands
    # with f32 accumulation, hence the looser tolerance).
    pooled = x.reshape(B, C, H * W).mean(axis=-1)
    feats = pooled @ wp
    ref = jnp.maximum(feats @ w1 + b1, 0.0) @ w2 + b2

    assert out.shape == (B, 2)
    assert jnp.allclose(out, ref, atol=2e-2, rtol=2e-2), "mismatch vs reference"

    print("KERNEL_OK")
</pallas_src>

<mosaic_0001>
module attributes {stable_mosaic.version = 11 : i64} {
  func.func @transfer_learning_kernel(%arg0: i32, %arg1: i32, %arg2: memref<2x4x256xf32, #tpu.memory_space<vmem>>, %arg3: memref<4x128xbf16, #tpu.memory_space<vmem>>, %arg4: memref<1x128xf32, #tpu.memory_space<vmem>>, %arg5: memref<128x128xbf16, #tpu.memory_space<vmem>>, %arg6: memref<1x128xf32, #tpu.memory_space<vmem>>, %arg7: memref<2x128xf32, #tpu.memory_space<vmem>>, %arg8: memref<2x4xf32, #tpu.memory_space<vmem>>) attributes {dimension_semantics = [#tpu.dimension_semantics<parallel>, #tpu.dimension_semantics<arbitrary>], iteration_bounds = array<i64: 1, 1>, scalar_prefetch = 0 : i64, scratch_operands = 1 : i64, tpu.core_type = #tpu.core_type<tc>, window_params = [{transform_indices = @transform_0, window_bounds = array<i64: 2, 4, 256>}, {pipeline_mode = #tpu.pipeline_mode<synchronous>, transform_indices = @transform_1, window_bounds = array<i64: 4, 128>}, {pipeline_mode = #tpu.pipeline_mode<synchronous>, transform_indices = @transform_2, window_bounds = array<i64: 1, 128>}, {pipeline_mode = #tpu.pipeline_mode<synchronous>, transform_indices = @transform_3, window_bounds = array<i64: 128, 128>}, {pipeline_mode = #tpu.pipeline_mode<synchronous>, transform_indices = @transform_4, window_bounds = array<i64: 1, 128>}, {transform_indices = @transform_5, window_bounds = array<i64: 2, 128>}]} {
    %c0_i32 = arith.constant 0 : i32
    %0 = arith.cmpi eq, %arg1, %c0_i32 : i32
    %1 = arith.extui %0 : i1 to i32
    %c0_i32_0 = arith.constant 0 : i32
    %2 = arith.cmpi ne, %1, %c0_i32_0 : i32
    scf.if %2 {
      %cst_9 = arith.constant 0.000000e+00 : f32
      %11 = vector.broadcast %cst_9 : f32 to vector<2x4xf32>
      %c0_10 = arith.constant 0 : index
      %c0_11 = arith.constant 0 : index
      %12 = vector.load %arg8[%c0_10, %c0_11] : memref<2x4xf32, #tpu.memory_space<vmem>>, vector<2x4xf32>
      tpu.vector_store %arg8[%c0_10, %c0_11], %11 {strides = array<i32>} : memref<2x4xf32, #tpu.memory_space<vmem>>, vector<2x4xf32>,
    } else {
    }
    %c0 = arith.constant 0 : index
    %c0_1 = arith.constant 0 : index
    %3 = vector.load %arg8[%c0, %c0_1] : memref<2x4xf32, #tpu.memory_space<vmem>>, vector<2x4xf32>
    %c0_2 = arith.constant 0 : index
    %c0_3 = arith.constant 0 : index
    %c0_4 = arith.constant 0 : index
    %4 = vector.load %arg2[%c0_2, %c0_3, %c0_4] : memref<2x4x256xf32, #tpu.memory_space<vmem>>, vector<2x4x256xf32>
    %cst = arith.constant dense<0.000000e+00> : vector<2x4xf32>
    %5 = vector.multi_reduction <add>, %4, %cst [2] : vector<2x4x256xf32> to vector<2x4xf32>
    %6 = arith.addf %3, %5 : vector<2x4xf32>
    %c0_5 = arith.constant 0 : index
    %c0_6 = arith.constant 0 : index
    %7 = vector.load %arg8[%c0_5, %c0_6] : memref<2x4xf32, #tpu.memory_space<vmem>>, vector<2x4xf32>
    tpu.vector_store %arg8[%c0_5, %c0_6], %6 {strides = array<i32>} : memref<2x4xf32, #tpu.memory_space<vmem>>, vector<2x4xf32>,
    %c0_i32_7 = arith.constant 0 : i32
    %8 = arith.cmpi eq, %arg1, %c0_i32_7 : i32
    %9 = arith.extui %8 : i1 to i32
    %c0_i32_8 = arith.constant 0 : i32
    %10 = arith.cmpi ne, %9, %c0_i32_8 : i32
    scf.if %10 {
      %c0_9 = arith.constant 0 : index
      %c0_10 = arith.constant 0 : index
      %11 = vector.load %arg8[%c0_9, %c0_10] : memref<2x4xf32, #tpu.memory_space<vmem>>, vector<2x4xf32>
      %12 = arith.truncf %11 : vector<2x4xf32> to vector<2x4xbf16>
      %c0_11 = arith.constant 0 : index
      %c0_12 = arith.constant 0 : index
      %13 = vector.load %arg3[%c0_11, %c0_12] : memref<4x128xbf16, #tpu.memory_space<vmem>>, vector<4x128xbf16>
      %cst_13 = arith.constant dense<0.000000e+00> : vector<2x128xf32>
      %14 = tpu.matmul %12, %13, %cst_13 {dimension_numbers = #tpu.dot_dimension_numbers<[1], [0], [0], [1], [0, 0, 1, 1], [], []>} : vector<2x4xbf16>, vector<4x128xbf16>, vector<2x128xf32> -> vector<2x128xf32>
      %c0_14 = arith.constant 0 : index
      %c0_15 = arith.constant 0 : index
      %15 = vector.load %arg4[%c0_14, %c0_15] : memref<1x128xf32, #tpu.memory_space<vmem>>, vector<1x128xf32>
      %16 = vector.broadcast %15 : vector<1x128xf32> to vector<2x128xf32>
      %17 = arith.addf %14, %16 : vector<2x128xf32>
      %cst_16 = arith.constant 0.000000e+00 : f32
      %18 = vector.broadcast %cst_16 : f32 to vector<2x128xf32>
      %19 = arith.maximumf %17, %18 : vector<2x128xf32>
      %20 = arith.truncf %19 : vector<2x128xf32> to vector<2x128xbf16>
      %c0_17 = arith.constant 0 : index
      %c0_18 = arith.constant 0 : index
      %21 = vector.load %arg5[%c0_17, %c0_18] : memref<128x128xbf16, #tpu.memory_space<vmem>>, vector<128x128xbf16>
      %cst_19 = arith.constant dense<0.000000e+00> : vector<2x128xf32>
      %22 = tpu.matmul %20, %21, %cst_19 {dimension_numbers = #tpu.dot_dimension_numbers<[1], [0], [0], [1], [0, 0, 1, 1], [], []>} : vector<2x128xbf16>, vector<128x128xbf16>, vector<2x128xf32> -> vector<2x128xf32>
      %c0_20 = arith.constant 0 : index
      %c0_21 = arith.constant 0 : index
      %23 = vector.load %arg6[%c0_20, %c0_21] : memref<1x128xf32, #tpu.memory_space<vmem>>, vector<1x128xf32>
      %24 = vector.broadcast %23 : vector<1x128xf32> to vector<2x128xf32>
      %25 = arith.addf %22, %24 : vector<2x128xf32>
      %c0_22 = arith.constant 0 : index
      %c0_23 = arith.constant 0 : index
      %26 = vector.load %arg7[%c0_22, %c0_23] : memref<2x128xf32, #tpu.memory_space<vmem>>, vector<2x128xf32>
      tpu.vector_store %arg7[%c0_22, %c0_23], %25 {strides = array<i32>} : memref<2x128xf32, #tpu.memory_space<vmem>>, vector<2x128xf32>,
    } else {
    }
    return
  }
  func.func @transform_0(%arg0: i32, %arg1: i32) -> (i32, i32, i32) {
    %c0_i32 = arith.constant 0 : i32
    %c0_i32_0 = arith.constant 0 : i32
    return %arg0, %c0_i32, %arg1 : i32, i32, i32
  }
  func.func @transform_1(%arg0: i32, %arg1: i32) -> (i32, i32) {
    %c0_i32 = arith.constant 0 : i32
    %c0_i32_0 = arith.constant 0 : i32
    %c0_i32_1 = arith.constant 0 : i32
    return %c0_i32, %c0_i32_0 : i32, i32
  }
  func.func @transform_2(%arg0: i32, %arg1: i32) -> (i32, i32) {
    %c0_i32 = arith.constant 0 : i32
    %c0_i32_0 = arith.constant 0 : i32
    %c0_i32_1 = arith.constant 0 : i32
    return %c0_i32, %c0_i32_0 : i32, i32
  }
  func.func @transform_3(%arg0: i32, %arg1: i32) -> (i32, i32) {
    %c0_i32 = arith.constant 0 : i32
    %c0_i32_0 = arith.constant 0 : i32
    %c0_i32_1 = arith.constant 0 : i32
    return %c0_i32, %c0_i32_0 : i32, i32
  }
  func.func @transform_4(%arg0: i32, %arg1: i32) -> (i32, i32) {
    %c0_i32 = arith.constant 0 : i32
    %c0_i32_0 = arith.constant 0 : i32
    %c0_i32_1 = arith.constant 0 : i32
    return %c0_i32, %c0_i32_0 : i32, i32
  }
  func.func @transform_5(%arg0: i32, %arg1: i32) -> (i32, i32) {
    %c0_i32 = arith.constant 0 : i32
    %c0_i32_0 = arith.constant 0 : i32
    return %arg0, %c0_i32 : i32, i32
  }
}

</mosaic_0001>

<llo_original>
// kernel: tpu_custom_call.1
$region0: #{tpu_custom_call.1}
  #allocation0 [shape = 'u32[]', space=smem, size = 0x4, offset = 0x4, fixed_abs, tag = 'smem constant byte address 0x4 - core index']
  #allocation1 [shape = 'u32[72,128]{1,0:T(1,128)}', space=vmem, size = 0x9000, scoped, tag = 'internal scratch']
  #allocation2 [shape = 'f32[2,4]{1,0:T(2,128)}', space=vmem, size = 0x400, scoped, tag = 'scratch operand']
  %s0 = inlined_call_operand.hbm [shape: f32[2,4,256], index: 0, kind: input, shape index: {}]
  %s1 = inlined_call_operand.hbm [shape: bf16[4,128], index: 1, kind: input, shape index: {}]
  %s2 = inlined_call_operand.vmem [shape: f32[1,128], index: 2, kind: input, shape index: {}]
  %s3 = inlined_call_operand.hbm [shape: bf16[128,128], index: 3, kind: input, shape index: {}]
  %s4 = inlined_call_operand.vmem [shape: f32[1,128], index: 4, kind: input, shape index: {}]
  %s5 = inlined_call_operand.hbm [shape: f32[2,128], index: 5, kind: output, shape index: {}]
  %s6 = sld [smem:[#allocation0]]
  $region50: #{tpu_custom_call.1} parent=0
    _
  %s8 = ssub.s32 1, %s6
  %s9 = scalar_select 0, %s8, %s6
  $region1: #{tpu_custom_call.1} parent=0
    #allocation3 [shape = 'u8[8192]{0}', space=vmem, size = 0x2000, scoped, tag = 'input window, operand 0, single buffered']
    #allocation4 [shape = 's32[1]{0}', space=sflag, size = 0x4, scoped, tag = 'scoped memory for tpu_custom_call.1']
    #allocation5 [shape = 's32[1]{0}', space=sflag, size = 0x4, scoped, tag = 'scoped memory for tpu_custom_call.1']
    #allocation6 [shape = 'u8[1024]{0}', space=vmem, size = 0x400, scoped, tag = 'input window, operand 1, single buffered']
    #allocation7 [shape = 's32[1]{0}', space=sflag, size = 0x4, scoped, tag = 'scoped memory for tpu_custom_call.1']
    #allocation8 [shape = 'u8[32768]{0}', space=vmem, size = 0x8000, scoped, tag = 'input window, operand 3, single buffered']
    #allocation9 [shape = 'u8[1024]{0}', space=vmem, size = 0x400, scoped, tag = 'output window, operand 0, single buffered']
    %10 = vsyncpa [#allocation4], 0
    %11 = vsyncpa [#allocation7], 0
    %12 = vsyncpa [#allocation5], 0
    // Predicated region
    $region2: #{tpu_custom_call.1} parent=1 // pred_check
      _
    $region3: #{tpu_custom_call.1} parent=1 // pred_check_branch
      %14 = sbr.rel (0) target = $region5
    $region4: #{tpu_custom_call.1} parent=1 // pred_region
      %16 = vsyncadd [#allocation4], 0
      %s17 = sshll.u32 %s0, 4
      %s18 = int_to_ptr.hbm [resolvable:$true] %s17
      %s19 = sshll.u32 [#allocation3], 4
      %s20 = int_to_ptr.vmem [resolvable:$true] %s19
      %25 = dma.hbm_to_vmem [thread:$0]  %s18, 256, %s20, [#allocation4], 128, 128, 8
    $region5: #{tpu_custom_call.1} parent=1 // pred_fallthru
      _
    // Predicated region
    $region6: #{tpu_custom_call.1} parent=1 // pred_check
      _
    $region7: #{tpu_custom_call.1} parent=1 // pred_check_branch
      %27 = sbr.rel (0) target = $region9
    $region8: #{tpu_custom_call.1} parent=1 // pred_region
      %29 = vsyncadd [#allocation7], 0
      %s31 = sshll.u32 %s1, 4
      %s32 = int_to_ptr.hbm [resolvable:$true] %s31
      %s33 = sshll.u32 [#allocation6], 4
      %s34 = int_to_ptr.vmem [resolvable:$true] %s33
      %36 = dma.hbm_to_vmem [thread:$0]  %s32, 32, %s34, [#allocation7]
    $region9: #{tpu_custom_call.1} parent=1 // pred_fallthru
      _
    // Predicated region
    $region10: #{tpu_custom_call.1} parent=1 // pred_check
      _
    $region11: #{tpu_custom_call.1} parent=1 // pred_check_branch
      %38 = sbr.rel (0) target = $region13
    $region12: #{tpu_custom_call.1} parent=1 // pred_region
      _
    $region13: #{tpu_custom_call.1} parent=1 // pred_fallthru
      _
    // Predicated region
    $region14: #{tpu_custom_call.1} parent=1 // pred_check
      _
    $region15: #{tpu_custom_call.1} parent=1 // pred_check_branch
      %40 = sbr.rel (0) target = $region17
    $region16: #{tpu_custom_call.1} parent=1 // pred_region
      %42 = vsyncadd [#allocation7], 0
      %s43 = sshll.u32 %s3, 4
      %s44 = int_to_ptr.hbm [resolvable:$true] %s43
      %s45 = sshll.u32 [#allocation8], 4
      %s46 = int_to_ptr.vmem [resolvable:$true] %s45
      %51 = dma.hbm_to_vmem [thread:$0]  %s44, 1024, %s46, [#allocation7], 64, 64, 4
    $region17: #{tpu_custom_call.1} parent=1 // pred_fallthru
      _
    // Predicated region
    $region18: #{tpu_custom_call.1} parent=1 // pred_check
      _
    $region19: #{tpu_custom_call.1} parent=1 // pred_check_branch
      %53 = sbr.rel (0) target = $region21
    $region20: #{tpu_custom_call.1} parent=1 // pred_region
      _
    $region21: #{tpu_custom_call.1} parent=1 // pred_fallthru
      _
    // Predicated region
    $region22: #{tpu_custom_call.1} parent=1 // pred_check
      _
    $region23: #{tpu_custom_call.1} parent=1 // pred_check_branch
      %55 = sbr.rel (0) target = $region25
    $region24: #{tpu_custom_call.1} parent=1 // pred_region
      %57 = dma.done [#allocation4], 256
    $region25: #{tpu_custom_call.1} parent=1 // pred_fallthru
      _
    // Predicated region
    $region26: #{tpu_custom_call.1} parent=1 // pred_check
      _
    $region27: #{tpu_custom_call.1} parent=1 // pred_check_branch
      %59 = sbr.rel (0) target = $region29
    $region28: #{tpu_custom_call.1} parent=1 // pred_region
      %61 = dma.done [#allocation7], 32
    $region29: #{tpu_custom_call.1} parent=1 // pred_fallthru
      _
    // Predicated region
    $region30: #{tpu_custom_call.1} parent=1 // pred_check
      _
    $region31: #{tpu_custom_call.1} parent=1 // pred_check_branch
      %63 = sbr.rel (0) target = $region33
    $region32: #{tpu_custom_call.1} parent=1 // pred_region
      %65 = dma.done [#allocation7], 1024
    $region33: #{tpu_custom_call.1} parent=1 // pred_fallthru
      _
    %p67 = scmp.eq.s32.totalorder 0, 0
    // Predicated region
    $region34: #{tpu_custom_call.1} parent=1 // pred_check
      %p68 = pneg %p67
    $region35: #{tpu_custom_call.1} parent=1 // pred_check_branch
      %70 = sbr.rel (%p68) target = $region37
    $region36: #{tpu_custom_call.1} parent=1 // pred_region
      %vm71 = vcmask 25600
      %72 = vst.msk [vmem:[#allocation2] sm:$0x3] %vm71, 0.0
    $region37: #{tpu_custom_call.1} parent=1 // pred_fallthru
      _
    %v73 = vld [vmem:[#allocation2] sm:$0x3]
    %v74 = vld [vmem:[#allocation3] sm:$0xff]
    %v75 = vld [vmem:[#allocation3 + $0x8] sm:$0xff]
    %78 = vst [vmem:[#allocation1] ss:$2 sm:$0xff] %v74
    %v79 = vld.sshfl [vmem:[#allocation1] sm:$0xff pattern:$0x75316420]
    %v80 = vld.sshfl [vmem:[#allocation1 + $0x8] sm:$0xff pattern:$0x75316420]
    %s81 = scalar_lea.vmem [#allocation1], 16
    %82 = vst [vmem:[%s81] ss:$2 sm:$0xff] %v75
    %v83 = vld.sshfl [vmem:[#allocation1 + $0x10] sm:$0xff pattern:$0x75316420]
    %v84 = vld.sshfl [vmem:[#allocation1 + $0x18] sm:$0xff pattern:$0x75316420]
    %vm89 = vcmask 1043456
    %v90 = vsel %vm89, %v79, 0.0
    %v91 = vsel %vm89, %v80, 0.0
    %v92 = vadd.f32 %v90, %v91
    %93 = vadd.xlane.f32.xlu0 %v92
    %v94 = vpop.xlane.xlu0 %93
    %v95 = vsel %vm89, %v83, 0.0
    %v96 = vsel %vm89, %v84, 0.0
    %v97 = vadd.f32 %v95, %v96
    %98 = vadd.xlane.f32.xlu0 %v97
    %v99 = vpop.xlane.xlu0 %98
    %v102 = vlaneseq
    %v103 = vand.u32 %v102, 127
    %v104 = vperm.slane %v94, %v103
    %v105 = vperm.slane %v99, %v103
    %vm106 = vcmask 1041409
    %v107 = vsel %vm106, %v105, %v104
    %v109 = vadd.f32 %v73, %v107
    %vm110 = vcmask 25600
    %111 = vst.msk [vmem:[#allocation2] sm:$0x3] %vm110, %v109
    // Predicated region
    $region38: #{tpu_custom_call.1} parent=1 // pred_check
      %p112 = pneg %p67
    $region39: #{tpu_custom_call.1} parent=1 // pred_check_branch
      %114 = sbr.rel (%p112) target = $region41
    $region40: #{tpu_custom_call.1} parent=1 // pred_region
      %v115 = vld [vmem:[#allocation2] sm:$0x3]
      %v116 = vpack.c.bf16 %v115, %v115
      %v117 = vld [vmem:[#allocation6] sm:$0x3]
      %v118 = vld [vmem:[%s2] sm:$0x1]
      %v120 = vperm.slane %v118, 0
      %vm122 = vcmask 31744
      %v124 = vsel %vm122, %v116, 0
      %vm126 = vcmask 1041408
      %v128 = vsel %vm126, %v117, 0
      %130 = vmatpush.bf16.msra.mxu0 0
      %131 = vmatpush.bf16.msra.mxu0 0
      %132 = vmatpush.bf16.msra.mxu0 0
      %133 = vmatpush.bf16.msra.mxu0 0
      %134 = vmatpush.bf16.msra.mxu0 0
      %135 = vmatpush.bf16.msra.mxu0 0
      %136 = vmatpush.bf16.msra.mxu0 0
      %137 = vmatpush.bf16.msra.mxu0 %v128
      %138 = vmatmul.bf16.gmra.mxu0 %v124
      %v139 = vpop.f32.mrf.mxu0
      %v140 = vadd.f32 %v120, %v139
      %v141 = vpop.f32.mrf.mxu0
      %142 = vdwg.mxu0
      %v143 = vmax.f32 %v140, 0.0
      %v144 = vpack.c.bf16 %v143, %v143
      %v145 = vld [vmem:[#allocation8] sm:$0xf]
      %v146 = vld [vmem:[#allocation8 + $0x4] sm:$0xf]
      %v147 = vld [vmem:[#allocation8 + $0x8] sm:$0xf]
      %v148 = vld [vmem:[#allocation8 + $0xc] sm:$0xf]
      %v149 = vld [vmem:[#allocation8 + $0x10] sm:$0xf]
      %v150 = vld [vmem:[#allocation8 + $0x14] sm:$0xf]
      %v151 = vld [vmem:[#allocation8 + $0x18] sm:$0xf]
      %v152 = vld [vmem:[#allocation8 + $0x1c] sm:$0xf]
      %v153 = vld [vmem:[#allocation8 + $0x20] sm:$0xf]
      %v154 = vld [vmem:[#allocation8 + $0x24] sm:$0xf]
      %v155 = vld [vmem:[#allocation8 + $0x28] sm:$0xf]
      %v156 = vld [vmem:[#allocation8 + $0x2c] sm:$0xf]
      %v157 = vld [vmem:[#allocation8 + $0x30] sm:$0xf]
      %v158 = vld [vmem:[#allocation8 + $0x34] sm:$0xf]
      %v159 = vld [vmem:[#allocation8 + $0x38] sm:$0xf]
      %v160 = vld [vmem:[#allocation8 + $0x3c] sm:$0xf]
      %v161 = vld [vmem:[%s4] sm:$0x1]
      %v163 = vperm.slane %v161, 0
      %v181 = vunpack.c.l.b16 %v145
      %v182 = vunpack.c.l.b16 %v146
      %v183 = vunpack.c.l.b16 %v147
      %v184 = vunpack.c.l.b16 %v148
      %v185 = vunpack.c.l.b16 %v149
      %v186 = vunpack.c.l.b16 %v150
      %v187 = vunpack.c.l.b16 %v151
      %v188 = vunpack.c.l.b16 %v152
      %v189 = vunpack.c.l.b16 %v153
      %v190 = vunpack.c.l.b16 %v154
      %v191 = vunpack.c.l.b16 %v155
      %v192 = vunpack.c.l.b16 %v156
      %v193 = vunpack.c.l.b16 %v157
      %v194 = vunpack.c.l.b16 %v158
      %v195 = vunpack.c.l.b16 %v159
      %v196 = vunpack.c.l.b16 %v160
      %v197 = vpack.c.b16 %v182, %v181
      %v198 = vpack.c.b16 %v184, %v183
      %v199 = vpack.c.b16 %v186, %v185
      %v200 = vpack.c.b16 %v188, %v187
      %v201 = vpack.c.b16 %v190, %v189
      %v202 = vpack.c.b16 %v192, %v191
      %v203 = vpack.c.b16 %v194, %v193
      %v204 = vpack.c.b16 %v196, %v195
      %213 = vmatpush.bf16.msra.mxu0 %v204
      %214 = vmatpush.bf16.msra.mxu0 %v203
      %215 = vmatpush.bf16.msra.mxu0 %v202
      %216 = vmatpush.bf16.msra.mxu0 %v201
      %217 = vmatpush.bf16.msra.mxu0 %v200
      %218 = vmatpush.bf16.msra.mxu0 %v199
      %219 = vmatpush.bf16.msra.mxu0 %v198
      %220 = vmatpush.bf16.msra.mxu0 %v197
      %221 = vmatmul.bf16.gmra.mxu0 %v144
      %v222 = vpop.f32.mrf.mxu0
      %v223 = vadd.f32 %v163, %v222
      %v224 = vpop.f32.mrf.mxu0
      %225 = vdwg.mxu0
      %226 = vst [vmem:[#allocation9] sm:$0x3] %v223
    $region41: #{tpu_custom_call.1} parent=1 // pred_fallthru
      _
    // Predicated region
    $region42: #{tpu_custom_call.1} parent=1 // pred_check
      _
    $region43: #{tpu_custom_call.1} parent=1 // pred_check_branch
      %228 = sbr.rel (0) target = $region45
    $region44: #{tpu_custom_call.1} parent=1 // pred_region
      %230 = vsyncadd [#allocation5], 0
      %s232 = sshll.u32 [#allocation9], 4
      %s233 = int_to_ptr.vmem [resolvable:$true] %s232
      %s234 = sshll.u32 %s5, 4
      %s235 = int_to_ptr.hbm [resolvable:$true] %s234
      %237 = dma.vmem_to_hbm [thread:$0]  %s233, 32, %s235, [#allocation5]
    $region45: #{tpu_custom_call.1} parent=1 // pred_fallthru
      _
    // Predicated region
    $region46: #{tpu_custom_call.1} parent=1 // pred_check
      _
    $region47: #{tpu_custom_call.1} parent=1 // pred_check_branch
      %239 = sbr.rel (0) target = $region49
    $region48: #{tpu_custom_call.1} parent=1 // pred_region
      %241 = dma.done [#allocation5], 32
    $region49: #{tpu_custom_call.1} parent=1 // pred_fallthru
      _
    %242 = vsyncpa [#allocation4], 1
    %243 = vsyncpa [#allocation7], 1
    %244 = vsyncpa [#allocation5], 1

</llo_original>
